<compile_context>
chip_gen: v7x
topology: tpu7x:2x2x1
jax: 0.10.0
libtpu: 0.0.40
codegen_flags: <defaults>
</compile_context>

<pallas_src>
import functools
import math

import jax
import jax.numpy as jnp
from jax.experimental import pallas as pl
from jax.experimental.pallas import tpu as pltpu

_LOG2E = math.log2(math.e)            # folded into q -> base-2 softmax (exp2 on EUP)
_MASK_LOG2 = -1000000.0 * _LOG2E      # reference's -1e6 mask value, in base-2 units


def _attn_kernel(vl_smem, vl_ref, q_ref, k_ref, v_ref, o_ref,
                 m_sc, l_sc, acc_sc, *, approx_recip):
    bb = pl.program_id(0)             # batch-tile index
    ki = pl.program_id(2)             # K-tile index (reduction axis, innermost)
    nk = pl.num_programs(2)

    tb = q_ref.shape[0]
    tk = k_ref.shape[1]

    @pl.when(ki == 0)
    def _init():
        m_sc[...] = jnp.full(m_sc.shape, -jnp.inf, dtype=m_sc.dtype)
        l_sc[...] = jnp.zeros(l_sc.shape, dtype=l_sc.dtype)
        acc_sc[...] = jnp.zeros(acc_sc.shape, dtype=acc_sc.dtype)

    # Scalar gating from the SMEM-prefetched valid_lens: min/max over the
    # (small, static) batch tile -- pure scalar-unit work.
    base = bb * tb
    min_vl = vl_smem[base]
    max_vl = vl_smem[base]
    for t in range(1, tb):
        min_vl = jnp.minimum(min_vl, vl_smem[base + t])
        max_vl = jnp.maximum(max_vl, vl_smem[base + t])

    k_start = ki * tk
    # A fully-masked K tile contributes exactly zero softmax weight provided
    # every row of the batch tile has at least one valid column (min_vl > 0),
    # so its whole compute (MXU + EUP + VPU) can be skipped.  When min_vl == 0
    # every tile must be processed so valid_len == 0 rows reproduce the
    # reference's uniform softmax over all K columns.
    needed = jnp.logical_or(k_start < max_vl, min_vl == 0)
    fully_valid = (k_start + tk) <= min_vl

    def tile_update(apply_mask):
        q = q_ref[...]                # (tb, tq, d); pre-scaled by log2(e)/sqrt(d)
        k = k_ref[...]                # (tb, tk, d)
        v = v_ref[...]                # (tb, tk, dv)

        # scores (base-2 units) = Q @ K^T: contraction over the LAST dim of
        # both operands (batched dot_general, no XLU transpose), f32 accumulate.
        s = jnp.einsum("bqd,bkd->bqk", q, k,
                       preferred_element_type=jnp.float32)    # (tb, tq, tk)

        if apply_mask:
            # Vectorized 1-D valid_lens mask: one iota + one compare + one
            # select per tile, independent of tb.
            vlb = vl_ref[...]                                  # (tb, 1, 1) int32
            col = jax.lax.broadcasted_iota(jnp.int32, s.shape, 2) + k_start
            s = jnp.where(col < vlb, s, jnp.float32(_MASK_LOG2))

        # Online (flash) softmax accumulation, base-2, f32 math everywhere
        # (v5e has no bf16 VPU/EUP; only the MXU operands are bf16).
        m_prev = m_sc[...]                                     # (tb, tq, 1)
        m_new = jnp.maximum(m_prev, jnp.max(s, axis=-1, keepdims=True))
        alpha = jnp.exp2(m_prev - m_new)
        p = jnp.exp2(s - m_new)                                # (tb, tq, tk)
        # NOTE: if profiling shows the XLU saturating, this row-sum could be
        # folded into the PV matmul via a ones column appended to V.
        l_sc[...] = alpha * l_sc[...] + jnp.sum(p, axis=-1, keepdims=True)
        pv = jnp.einsum("bqk,bkv->bqv", p.astype(v.dtype), v,
                        preferred_element_type=jnp.float32)    # (tb, tq, dv)
        acc_sc[...] = alpha * acc_sc[...] + pv
        m_sc[...] = m_new

    # Common case: tile fully inside every row's valid length -> no mask work.
    @pl.when(jnp.logical_and(needed, fully_valid))
    def _unmasked():
        tile_update(apply_mask=False)

    # Partially valid tile (or valid_len == 0 rows present): masked path.
    @pl.when(jnp.logical_and(needed, jnp.logical_not(fully_valid)))
    def _masked():
        tile_update(apply_mask=True)

    @pl.when(ki == nk - 1)
    def _finalize():
        inv_l = pl.reciprocal(l_sc[...], approx=approx_recip)
        o_ref[...] = (acc_sc[...] * inv_l).astype(o_ref.dtype)


def _pick_tile(n, target, align):
    """Largest multiple of `align` that divides n and is <= target; else n (full)."""
    if n <= target:
        return n
    t = (target // align) * align
    while t >= align:
        if n % t == 0:
            return t
        t -= align
    return n


def _pick_batch_tile(B, tq, tk):
    """Batch several (small) items per grid step to amortize the ~0.35us/step cost."""
    for cand in range(min(B, 16), 0, -1):
        if B % cand == 0 and cand * tq <= 512 and cand * tk <= 1024:
            return cand
    return 1


def _ensure_parallel(B, Q, tb, tq, q_align):
    """Keep the 'parallel' grid extent >= 2 so both v7x TensorCores get work."""
    def extent(tb_, tq_):
        return (B // tb_) * (Q // tq_)

    # Shed batch tiling first (does not change HBM traffic, only step count).
    while tb > 1 and extent(tb, tq) < 2:
        tb -= 1
        while B % tb:
            tb -= 1
    if extent(tb, tq) >= 2:
        return tb, tq
    # Then shrink the Q tile (costs extra K/V re-streaming, so last resort).
    cand = ((tq // 2) // q_align) * q_align
    while cand >= q_align:
        if Q % cand == 0 and extent(tb, cand) >= 2:
            return tb, cand
        cand -= q_align
    return tb, tq


def dot_product_attention(queries, keys, values, valid_lens=None, *,
                          mxu_dtype=jnp.bfloat16):
    """Pallas scaled dot-product attention with masked softmax.

    queries: (B, Q, d); keys: (B, K, d); values: (B, K, dv); valid_lens: (B,) or None.
    mxu_dtype: dtype of the MXU matmul operands (default bf16, MXU-native on
      v5e/v6e/v7x); accumulation and all softmax math stay f32.  Pass None for
      exact-f32 operand semantics (parity testing).
    """
    B, Q, d = queries.shape
    _, K, _ = keys.shape
    dv = values.shape[-1]
    out_dtype = queries.dtype

    if valid_lens is None:
        valid_lens = jnp.full((B,), K, dtype=jnp.int32)
    valid_lens = valid_lens.astype(jnp.int32)
    vl_vmem = valid_lens.reshape(B, 1, 1)          # vectorized per-batch mask bound

    # Fold 1/sqrt(d) AND log2(e) (base-2 softmax) into q once here, so the
    # scale is not re-applied on every K tile inside the kernel.
    scale = jnp.float32(_LOG2E / math.sqrt(d))
    queries = queries.astype(jnp.float32) * scale

    if mxu_dtype is not None:
        queries = queries.astype(mxu_dtype)
        keys = keys.astype(mxu_dtype)
        values = values.astype(mxu_dtype)
    else:
        queries = queries.astype(keys.dtype)

    op_bytes = jnp.dtype(queries.dtype).itemsize
    q_align = 16 if op_bytes == 2 else 8           # bf16 sublane tile = 16 rows
    tq = _pick_tile(Q, 512, q_align)               # big Q tile -> fewer K/V re-streams
    tk = _pick_tile(K, 512, 128)                   # lane-aligned K tile
    tb = _pick_batch_tile(B, tq, tk)
    tb, tq = _ensure_parallel(B, Q, tb, tq, q_align)

    grid = (B // tb, Q // tq, K // tk)

    # VMEM estimate (double-buffered in/out blocks + resident scratch); raise the
    # scoped limit only if we get near v5e's 16 MiB default.
    est = (2 * (tb * (tq * d + tk * d + tk * dv) * op_bytes
                + tb * tq * dv * jnp.dtype(out_dtype).itemsize + tb * 4)
           + tb * tq * (dv + 2) * 4)
    vmem_limit = None
    if est > 12 * 1024 * 1024:
        vmem_limit = min(int(est * 3 // 2), 48 * 1024 * 1024)

    grid_spec = pltpu.PrefetchScalarGridSpec(
        num_scalar_prefetch=1,                     # valid_lens -> SMEM (scalar gating)
        grid=grid,
        in_specs=[
            pl.BlockSpec((tb, 1, 1), lambda b, qi, ki, vl: (b, 0, 0)),     # valid_lens
            pl.BlockSpec((tb, tq, d), lambda b, qi, ki, vl: (b, qi, 0)),   # Q
            pl.BlockSpec((tb, tk, d), lambda b, qi, ki, vl: (b, ki, 0)),   # K
            pl.BlockSpec((tb, tk, dv), lambda b, qi, ki, vl: (b, ki, 0)),  # V
        ],
        out_specs=pl.BlockSpec((tb, tq, dv), lambda b, qi, ki, vl: (b, qi, 0)),
        scratch_shapes=[
            pltpu.VMEM((tb, tq, 1), jnp.float32),    # running max (base-2)
            pltpu.VMEM((tb, tq, 1), jnp.float32),    # running softmax denominator
            pltpu.VMEM((tb, tq, dv), jnp.float32),   # output accumulator
        ],
    )

    cost = pl.CostEstimate(
        flops=2 * B * Q * K * (d + dv),
        transcendentals=B * Q * K,
        bytes_accessed=(queries.size + keys.size + values.size) * op_bytes
                       + B * Q * dv * jnp.dtype(out_dtype).itemsize,
    )

    kernel = functools.partial(_attn_kernel, approx_recip=mxu_dtype is not None)

    return pl.pallas_call(
        kernel,
        out_shape=jax.ShapeDtypeStruct((B, Q, dv), out_dtype),
        grid_spec=grid_spec,
        compiler_params=pltpu.CompilerParams(
            dimension_semantics=("parallel", "parallel", "arbitrary"),
            vmem_limit_bytes=vmem_limit),
        cost_estimate=cost,
    )(valid_lens, vl_vmem, queries, keys, values)


def _reference(queries, keys, values, valid_lens):
    d = queries.shape[-1]
    scores = jnp.einsum("bqd,bkd->bqk", queries, keys) / math.sqrt(d)
    if valid_lens is not None:
        K = keys.shape[1]
        mask = jnp.arange(K)[None, None, :] < valid_lens[:, None, None]
        scores = jnp.where(mask, scores, -1000000.0)
    w = jax.nn.softmax(scores, axis=-1)
    return jnp.einsum("bqk,bkv->bqv", w, values)


if __name__ == "__main__":
    key = jax.random.PRNGKey(0)

    # --- small shapes matching the module's typical use -----------------------
    B, Q, K, d, dv = 2, 8, 8, 32, 32
    kq, kk, kv = jax.random.split(key, 3)
    queries = jax.random.normal(kq, (B, Q, d), dtype=jnp.float32)
    keys = jax.random.normal(kk, (B, K, d), dtype=jnp.float32)
    values = jax.random.normal(kv, (B, K, dv), dtype=jnp.float32)
    valid_lens = jnp.array([3, 6], dtype=jnp.int32)
    ref = _reference(queries, keys, values, valid_lens)

    # exact f32-operand parity path
    out_f32 = jax.block_until_ready(
        dot_product_attention(queries, keys, values, valid_lens, mxu_dtype=None))
    assert out_f32.shape == (B, Q, dv)
    assert jnp.allclose(out_f32, ref, atol=2e-3, rtol=2e-3), "mismatch (f32, masked)"

    # default bf16-MXU path (f32 accumulation / softmax math)
    out_bf = jax.block_until_ready(
        dot_product_attention(queries, keys, values, valid_lens))
    assert jnp.allclose(out_bf, ref, atol=5e-2, rtol=5e-2), "mismatch (bf16, masked)"

    # unmasked path (valid_lens=None)
    out_nl = jax.block_until_ready(dot_product_attention(queries, keys, values, None))
    ref_nl = _reference(queries, keys, values, None)
    assert jnp.allclose(out_nl, ref_nl, atol=5e-2, rtol=5e-2), "mismatch (no mask)"

    # valid_len == 0 corner case (reference -> uniform weights over all K columns)
    vl0 = jnp.array([0, 6], dtype=jnp.int32)
    out0 = jax.block_until_ready(
        dot_product_attention(queries, keys, values, vl0, mxu_dtype=None))
    ref0 = _reference(queries, keys, values, vl0)
    assert jnp.allclose(out0, ref0, atol=2e-3, rtol=2e-3), "mismatch (valid_len=0)"

    # --- larger shape exercising the tiled flash path (2 K tiles, masked-tile skip)
    B2, Q2, K2, d2, dv2 = 2, 512, 1024, 64, 64
    k1, k2, k3 = jax.random.split(jax.random.PRNGKey(1), 3)
    q2 = jax.random.normal(k1, (B2, Q2, d2), dtype=jnp.float32)
    ky2 = jax.random.normal(k2, (B2, K2, d2), dtype=jnp.float32)
    v2 = jax.random.normal(k3, (B2, K2, dv2), dtype=jnp.float32)
    vl2 = jnp.array([300, 1024], dtype=jnp.int32)
    ref2 = _reference(q2, ky2, v2, vl2)

    out2_f32 = jax.block_until_ready(
        dot_product_attention(q2, ky2, v2, vl2, mxu_dtype=None))
    assert out2_f32.shape == (B2, Q2, dv2)
    assert jnp.allclose(out2_f32, ref2, atol=2e-3, rtol=2e-3), "mismatch (tiled f32)"

    out2_bf = jax.block_until_ready(dot_product_attention(q2, ky2, v2, vl2))
    assert jnp.allclose(out2_bf, ref2, atol=5e-2, rtol=5e-2), "mismatch (tiled bf16)"

    print("KERNEL_OK")
</pallas_src>

<mosaic_0001>
module attributes {stable_mosaic.version = 11 : i64} {
  func.func @_attn_kernel(%arg0: i32, %arg1: i32, %arg2: i32, %arg3: memref<2xi32, #tpu.memory_space<smem>>, %arg4: memref<1x1x1xi32, #tpu.memory_space<vmem>>, %arg5: memref<1x8x32xf32, #tpu.memory_space<vmem>>, %arg6: memref<1x8x32xf32, #tpu.memory_space<vmem>>, %arg7: memref<1x8x32xf32, #tpu.memory_space<vmem>>, %arg8: memref<1x8x32xf32, #tpu.memory_space<vmem>>, %arg9: memref<1x8x1xf32, #tpu.memory_space<vmem>>, %arg10: memref<1x8x1xf32, #tpu.memory_space<vmem>>, %arg11: memref<1x8x32xf32, #tpu.memory_space<vmem>>) attributes {dimension_semantics = [#tpu.dimension_semantics<parallel>, #tpu.dimension_semantics<parallel>, #tpu.dimension_semantics<arbitrary>], iteration_bounds = array<i64: 2, 1, 1>, scalar_prefetch = 1 : i64, scratch_operands = 3 : i64, tpu.core_type = #tpu.core_type<tc>, window_params = [{transform_indices = @transform_0, window_bounds = array<i64: 1, 1, 1>}, {transform_indices = @transform_1, window_bounds = array<i64: 1, 8, 32>}, {transform_indices = @transform_2, window_bounds = array<i64: 1, 8, 32>}, {transform_indices = @transform_3, window_bounds = array<i64: 1, 8, 32>}, {transform_indices = @transform_4, window_bounds = array<i64: 1, 8, 32>}]} {
    %c0_i32 = arith.constant 0 : i32
    %0 = arith.cmpi eq, %arg2, %c0_i32 : i32
    %1 = arith.extui %0 : i1 to i32
    %c0_i32_0 = arith.constant 0 : i32
    %2 = arith.cmpi ne, %1, %c0_i32_0 : i32
    scf.if %2 {
      %cst = arith.constant 0xFF800000 : f32
      %24 = vector.broadcast %cst : f32 to vector<1x8x1xf32>
      %c0 = arith.constant 0 : index
      %c0_7 = arith.constant 0 : index
      %c0_8 = arith.constant 0 : index
      %25 = vector.load %arg9[%c0, %c0_7, %c0_8] : memref<1x8x1xf32, #tpu.memory_space<vmem>>, vector<1x8x1xf32>
      tpu.vector_store %arg9[%c0, %c0_7, %c0_8], %24 {strides = array<i32>} : memref<1x8x1xf32, #tpu.memory_space<vmem>>, vector<1x8x1xf32>,
      %cst_9 = arith.constant 0.000000e+00 : f32
      %26 = vector.broadcast %cst_9 : f32 to vector<1x8x1xf32>
      %c0_10 = arith.constant 0 : index
      %c0_11 = arith.constant 0 : index
      %c0_12 = arith.constant 0 : index
      %27 = vector.load %arg10[%c0_10, %c0_11, %c0_12] : memref<1x8x1xf32, #tpu.memory_space<vmem>>, vector<1x8x1xf32>
      tpu.vector_store %arg10[%c0_10, %c0_11, %c0_12], %26 {strides = array<i32>} : memref<1x8x1xf32, #tpu.memory_space<vmem>>, vector<1x8x1xf32>,
      %cst_13 = arith.constant 0.000000e+00 : f32
      %28 = vector.broadcast %cst_13 : f32 to vector<1x8x32xf32>
      %c0_14 = arith.constant 0 : index
      %c0_15 = arith.constant 0 : index
      %c0_16 = arith.constant 0 : index
      %29 = vector.load %arg11[%c0_14, %c0_15, %c0_16] : memref<1x8x32xf32, #tpu.memory_space<vmem>>, vector<1x8x32xf32>
      tpu.vector_store %arg11[%c0_14, %c0_15, %c0_16], %28 {strides = array<i32>} : memref<1x8x32xf32, #tpu.memory_space<vmem>>, vector<1x8x32xf32>,
    } else {
    }
    %c1_i32 = arith.constant 1 : i32
    %3 = arith.muli %arg0, %c1_i32 : i32
    %4 = arith.index_cast %3 : i32 to index
    %5 = memref.load %arg3[%4] : memref<2xi32, #tpu.memory_space<smem>>
    %6 = arith.index_cast %3 : i32 to index
    %7 = memref.load %arg3[%6] : memref<2xi32, #tpu.memory_space<smem>>
    %c8_i32 = arith.constant 8 : i32
    %8 = arith.muli %arg2, %c8_i32 : i32
    %9 = arith.cmpi slt, %8, %7 : i32
    %c0_i32_1 = arith.constant 0 : i32
    %10 = arith.cmpi eq, %5, %c0_i32_1 : i32
    %11 = arith.ori %9, %10 : i1
    %c8_i32_2 = arith.constant 8 : i32
    %12 = arith.addi %8, %c8_i32_2 : i32
    %13 = arith.cmpi sle, %12, %5 : i32
    %14 = arith.andi %11, %13 : i1
    %15 = arith.extui %14 : i1 to i32
    %c0_i32_3 = arith.constant 0 : i32
    %16 = arith.cmpi ne, %15, %c0_i32_3 : i32
    scf.if %16 {
      %c0 = arith.constant 0 : index
      %c0_7 = arith.constant 0 : index
      %c0_8 = arith.constant 0 : index
      %24 = vector.load %arg5[%c0, %c0_7, %c0_8] : memref<1x8x32xf32, #tpu.memory_space<vmem>>, vector<1x8x32xf32>
      %c0_9 = arith.constant 0 : index
      %c0_10 = arith.constant 0 : index
      %c0_11 = arith.constant 0 : index
      %25 = vector.load %arg6[%c0_9, %c0_10, %c0_11] : memref<1x8x32xf32, #tpu.memory_space<vmem>>, vector<1x8x32xf32>
      %c0_12 = arith.constant 0 : index
      %c0_13 = arith.constant 0 : index
      %c0_14 = arith.constant 0 : index
      %26 = vector.load %arg7[%c0_12, %c0_13, %c0_14] : memref<1x8x32xf32, #tpu.memory_space<vmem>>, vector<1x8x32xf32>
      "tpu.trace_start"() <{level = 10 : i32, message = "bqd,bkd->bqk"}> : () -> ()
      %cst = arith.constant dense<0.000000e+00> : vector<1x8x8xf32>
      %27 = tpu.matmul %24, %25, %cst {dimension_numbers = #tpu.dot_dimension_numbers<[2], [2], [1], [1], [0, 0, 0, 1, 1, 1], [0], [0]>} : vector<1x8x32xf32>, vector<1x8x32xf32>, vector<1x8x8xf32> -> vector<1x8x8xf32>
      "tpu.trace_stop"() : () -> ()
      %c0_15 = arith.constant 0 : index
      %c0_16 = arith.constant 0 : index
      %c0_17 = arith.constant 0 : index
      %28 = vector.load %arg9[%c0_15, %c0_16, %c0_17] : memref<1x8x1xf32, #tpu.memory_space<vmem>>, vector<1x8x1xf32>
      %cst_18 = arith.constant dense<0xFF800000> : vector<1x8xf32>
      %29 = vector.multi_reduction <maximumf>, %27, %cst_18 [2] : vector<1x8x8xf32> to vector<1x8xf32>
      %30 = vector.shape_cast %29 : vector<1x8xf32> to vector<1x8x1xf32>
      %31 = arith.maximumf %28, %30 : vector<1x8x1xf32>
      %32 = arith.subf %28, %31 : vector<1x8x1xf32>
      %33 = math.exp2 %32 : vector<1x8x1xf32>
      %34 = vector.broadcast %31 : vector<1x8x1xf32> to vector<1x8x8xf32>
      %35 = arith.subf %27, %34 : vector<1x8x8xf32>
      %36 = math.exp2 %35 : vector<1x8x8xf32>
      %c0_19 = arith.constant 0 : index
      %c0_20 = arith.constant 0 : index
      %c0_21 = arith.constant 0 : index
      %37 = vector.load %arg10[%c0_19, %c0_20, %c0_21] : memref<1x8x1xf32, #tpu.memory_space<vmem>>, vector<1x8x1xf32>
      %38 = arith.mulf %33, %37 : vector<1x8x1xf32>
      %cst_22 = arith.constant dense<0.000000e+00> : vector<1x8xf32>
      %39 = vector.multi_reduction <add>, %36, %cst_22 [2] : vector<1x8x8xf32> to vector<1x8xf32>
      %40 = vector.shape_cast %39 : vector<1x8xf32> to vector<1x8x1xf32>
      %41 = arith.addf %38, %40 : vector<1x8x1xf32>
      %c0_23 = arith.constant 0 : index
      %c0_24 = arith.constant 0 : index
      %c0_25 = arith.constant 0 : index
      %42 = vector.load %arg10[%c0_23, %c0_24, %c0_25] : memref<1x8x1xf32, #tpu.memory_space<vmem>>, vector<1x8x1xf32>
      tpu.vector_store %arg10[%c0_23, %c0_24, %c0_25], %41 {strides = array<i32>} : memref<1x8x1xf32, #tpu.memory_space<vmem>>, vector<1x8x1xf32>,
      "tpu.trace_start"() <{level = 10 : i32, message = "bqk,bkv->bqv"}> : () -> ()
      %cst_26 = arith.constant dense<0.000000e+00> : vector<1x8x32xf32>
      %43 = tpu.matmul %36, %26, %cst_26 {dimension_numbers = #tpu.dot_dimension_numbers<[2], [1], [1], [2], [0, 0, 0, 1, 1, 2], [0], [0]>} : vector<1x8x8xf32>, vector<1x8x32xf32>, vector<1x8x32xf32> -> vector<1x8x32xf32>
      "tpu.trace_stop"() : () -> ()
      %c0_27 = arith.constant 0 : index
      %c0_28 = arith.constant 0 : index
      %c0_29 = arith.constant 0 : index
      %44 = vector.load %arg11[%c0_27, %c0_28, %c0_29] : memref<1x8x32xf32, #tpu.memory_space<vmem>>, vector<1x8x32xf32>
      %45 = vector.broadcast %33 : vector<1x8x1xf32> to vector<1x8x32xf32>
      %46 = arith.mulf %45, %44 : vector<1x8x32xf32>
      %47 = arith.addf %46, %43 : vector<1x8x32xf32>
      %c0_30 = arith.constant 0 : index
      %c0_31 = arith.constant 0 : index
      %c0_32 = arith.constant 0 : index
      %48 = vector.load %arg11[%c0_30, %c0_31, %c0_32] : memref<1x8x32xf32, #tpu.memory_space<vmem>>, vector<1x8x32xf32>
      tpu.vector_store %arg11[%c0_30, %c0_31, %c0_32], %47 {strides = array<i32>} : memref<1x8x32xf32, #tpu.memory_space<vmem>>, vector<1x8x32xf32>,
      %c0_33 = arith.constant 0 : index
      %c0_34 = arith.constant 0 : index
      %c0_35 = arith.constant 0 : index
      %49 = vector.load %arg9[%c0_33, %c0_34, %c0_35] : memref<1x8x1xf32, #tpu.memory_space<vmem>>, vector<1x8x1xf32>
      tpu.vector_store %arg9[%c0_33, %c0_34, %c0_35], %31 {strides = array<i32>} : memref<1x8x1xf32, #tpu.memory_space<vmem>>, vector<1x8x1xf32>,
    } else {
    }
    %true = arith.constant true
    %17 = arith.xori %13, %true : i1
    %18 = arith.andi %11, %17 : i1
    %19 = arith.extui %18 : i1 to i32
    %c0_i32_4 = arith.constant 0 : i32
    %20 = arith.cmpi ne, %19, %c0_i32_4 : i32
    scf.if %20 {
      %c0 = arith.constant 0 : index
      %c0_7 = arith.constant 0 : index
      %c0_8 = arith.constant 0 : index
      %24 = vector.load %arg5[%c0, %c0_7, %c0_8] : memref<1x8x32xf32, #tpu.memory_space<vmem>>, vector<1x8x32xf32>
      %c0_9 = arith.constant 0 : index
      %c0_10 = arith.constant 0 : index
      %c0_11 = arith.constant 0 : index
      %25 = vector.load %arg6[%c0_9, %c0_10, %c0_11] : memref<1x8x32xf32, #tpu.memory_space<vmem>>, vector<1x8x32xf32>
      %c0_12 = arith.constant 0 : index
      %c0_13 = arith.constant 0 : index
      %c0_14 = arith.constant 0 : index
      %26 = vector.load %arg7[%c0_12, %c0_13, %c0_14] : memref<1x8x32xf32, #tpu.memory_space<vmem>>, vector<1x8x32xf32>
      "tpu.trace_start"() <{level = 10 : i32, message = "bqd,bkd->bqk"}> : () -> ()
      %cst = arith.constant dense<0.000000e+00> : vector<1x8x8xf32>
      %27 = tpu.matmul %24, %25, %cst {dimension_numbers = #tpu.dot_dimension_numbers<[2], [2], [1], [1], [0, 0, 0, 1, 1, 1], [0], [0]>} : vector<1x8x32xf32>, vector<1x8x32xf32>, vector<1x8x8xf32> -> vector<1x8x8xf32>
      "tpu.trace_stop"() : () -> ()
      %c0_15 = arith.constant 0 : index
      %c0_16 = arith.constant 0 : index
      %c0_17 = arith.constant 0 : index
      %28 = vector.load %arg4[%c0_15, %c0_16, %c0_17] : memref<1x1x1xi32, #tpu.memory_space<vmem>>, vector<1x1x1xi32>
      %29 = tpu.iota {dimensions = array<i32: 2>} : vector<1x8x8xi32>
      %30 = vector.broadcast %8 : i32 to vector<1x8x8xi32>
      %31 = arith.addi %29, %30 : vector<1x8x8xi32>
      %32 = vector.broadcast %28 : vector<1x1x1xi32> to vector<1x8x8xi32>
      %33 = arith.cmpi slt, %31, %32 : vector<1x8x8xi32>
      %cst_18 = arith.constant 0xC9B01C38 : f32
      %34 = vector.broadcast %cst_18 : f32 to vector<1x8x8xf32>
      %35 = arith.select %33, %27, %34 : vector<1x8x8xi1>, vector<1x8x8xf32>
      %c0_19 = arith.constant 0 : index
      %c0_20 = arith.constant 0 : index
      %c0_21 = arith.constant 0 : index
      %36 = vector.load %arg9[%c0_19, %c0_20, %c0_21] : memref<1x8x1xf32, #tpu.memory_space<vmem>>, vector<1x8x1xf32>
      %cst_22 = arith.constant dense<0xFF800000> : vector<1x8xf32>
      %37 = vector.multi_reduction <maximumf>, %35, %cst_22 [2] : vector<1x8x8xf32> to vector<1x8xf32>
      %38 = vector.shape_cast %37 : vector<1x8xf32> to vector<1x8x1xf32>
      %39 = arith.maximumf %36, %38 : vector<1x8x1xf32>
      %40 = arith.subf %36, %39 : vector<1x8x1xf32>
      %41 = math.exp2 %40 : vector<1x8x1xf32>
      %42 = vector.broadcast %39 : vector<1x8x1xf32> to vector<1x8x8xf32>
      %43 = arith.subf %35, %42 : vector<1x8x8xf32>
      %44 = math.exp2 %43 : vector<1x8x8xf32>
      %c0_23 = arith.constant 0 : index
      %c0_24 = arith.constant 0 : index
      %c0_25 = arith.constant 0 : index
      %45 = vector.load %arg10[%c0_23, %c0_24, %c0_25] : memref<1x8x1xf32, #tpu.memory_space<vmem>>, vector<1x8x1xf32>
      %46 = arith.mulf %41, %45 : vector<1x8x1xf32>
      %cst_26 = arith.constant dense<0.000000e+00> : vector<1x8xf32>
      %47 = vector.multi_reduction <add>, %44, %cst_26 [2] : vector<1x8x8xf32> to vector<1x8xf32>
      %48 = vector.shape_cast %47 : vector<1x8xf32> to vector<1x8x1xf32>
      %49 = arith.addf %46, %48 : vector<1x8x1xf32>
      %c0_27 = arith.constant 0 : index
      %c0_28 = arith.constant 0 : index
      %c0_29 = arith.constant 0 : index
      %50 = vector.load %arg10[%c0_27, %c0_28, %c0_29] : memref<1x8x1xf32, #tpu.memory_space<vmem>>, vector<1x8x1xf32>
      tpu.vector_store %arg10[%c0_27, %c0_28, %c0_29], %49 {strides = array<i32>} : memref<1x8x1xf32, #tpu.memory_space<vmem>>, vector<1x8x1xf32>,
      "tpu.trace_start"() <{level = 10 : i32, message = "bqk,bkv->bqv"}> : () -> ()
      %cst_30 = arith.constant dense<0.000000e+00> : vector<1x8x32xf32>
      %51 = tpu.matmul %44, %26, %cst_30 {dimension_numbers = #tpu.dot_dimension_numbers<[2], [1], [1], [2], [0, 0, 0, 1, 1, 2], [0], [0]>} : vector<1x8x8xf32>, vector<1x8x32xf32>, vector<1x8x32xf32> -> vector<1x8x32xf32>
      "tpu.trace_stop"() : () -> ()
      %c0_31 = arith.constant 0 : index
      %c0_32 = arith.constant 0 : index
      %c0_33 = arith.constant 0 : index
      %52 = vector.load %arg11[%c0_31, %c0_32, %c0_33] : memref<1x8x32xf32, #tpu.memory_space<vmem>>, vector<1x8x32xf32>
      %53 = vector.broadcast %41 : vector<1x8x1xf32> to vector<1x8x32xf32>
      %54 = arith.mulf %53, %52 : vector<1x8x32xf32>
      %55 = arith.addf %54, %51 : vector<1x8x32xf32>
      %c0_34 = arith.constant 0 : index
      %c0_35 = arith.constant 0 : index
      %c0_36 = arith.constant 0 : index
      %56 = vector.load %arg11[%c0_34, %c0_35, %c0_36] : memref<1x8x32xf32, #tpu.memory_space<vmem>>, vector<1x8x32xf32>
      tpu.vector_store %arg11[%c0_34, %c0_35, %c0_36], %55 {strides = array<i32>} : memref<1x8x32xf32, #tpu.memory_space<vmem>>, vector<1x8x32xf32>,
      %c0_37 = arith.constant 0 : index
      %c0_38 = arith.constant 0 : index
      %c0_39 = arith.constant 0 : index
      %57 = vector.load %arg9[%c0_37, %c0_38, %c0_39] : memref<1x8x1xf32, #tpu.memory_space<vmem>>, vector<1x8x1xf32>
      tpu.vector_store %arg9[%c0_37, %c0_38, %c0_39], %39 {strides = array<i32>} : memref<1x8x1xf32, #tpu.memory_space<vmem>>, vector<1x8x1xf32>,
    } else {
    }
    %c0_i32_5 = arith.constant 0 : i32
    %21 = arith.cmpi eq, %arg2, %c0_i32_5 : i32
    %22 = arith.extui %21 : i1 to i32
    %c0_i32_6 = arith.constant 0 : i32
    %23 = arith.cmpi ne, %22, %c0_i32_6 : i32
    scf.if %23 {
      %c0 = arith.constant 0 : index
      %c0_7 = arith.constant 0 : index
      %c0_8 = arith.constant 0 : index
      %24 = vector.load %arg10[%c0, %c0_7, %c0_8] : memref<1x8x1xf32, #tpu.memory_space<vmem>>, vector<1x8x1xf32>
      %25 = tpu.reciprocal %24 : vector<1x8x1xf32> -> vector<1x8x1xf32>
      %c0_9 = arith.constant 0 : index
      %c0_10 = arith.constant 0 : index
      %c0_11 = arith.constant 0 : index
      %26 = vector.load %arg11[%c0_9, %c0_10, %c0_11] : memref<1x8x32xf32, #tpu.memory_space<vmem>>, vector<1x8x32xf32>
      %27 = vector.broadcast %25 : vector<1x8x1xf32> to vector<1x8x32xf32>
      %28 = arith.mulf %26, %27 : vector<1x8x32xf32>
      %c0_12 = arith.constant 0 : index
      %c0_13 = arith.constant 0 : index
      %c0_14 = arith.constant 0 : index
      %29 = vector.load %arg8[%c0_12, %c0_13, %c0_14] : memref<1x8x32xf32, #tpu.memory_space<vmem>>, vector<1x8x32xf32>
      tpu.vector_store %arg8[%c0_12, %c0_13, %c0_14], %28 {strides = array<i32>} : memref<1x8x32xf32, #tpu.memory_space<vmem>>, vector<1x8x32xf32>,
    } else {
    }
    return
  }
  func.func @transform_0(%arg0: i32, %arg1: i32, %arg2: i32, %arg3: memref<2xi32, #tpu.memory_space<smem>>) -> (i32, i32, i32) {
    %c0_i32 = arith.constant 0 : i32
    %c0_i32_0 = arith.constant 0 : i32
    %c0_i32_1 = arith.constant 0 : i32
    return %arg0, %c0_i32, %c0_i32_0 : i32, i32, i32
  }
  func.func @transform_1(%arg0: i32, %arg1: i32, %arg2: i32, %arg3: memref<2xi32, #tpu.memory_space<smem>>) -> (i32, i32, i32) {
    %c0_i32 = arith.constant 0 : i32
    %c0_i32_0 = arith.constant 0 : i32
    return %arg0, %arg1, %c0_i32 : i32, i32, i32
  }
  func.func @transform_2(%arg0: i32, %arg1: i32, %arg2: i32, %arg3: memref<2xi32, #tpu.memory_space<smem>>) -> (i32, i32, i32) {
    %c0_i32 = arith.constant 0 : i32
    %c0_i32_0 = arith.constant 0 : i32
    return %arg0, %arg2, %c0_i32 : i32, i32, i32
  }
  func.func @transform_3(%arg0: i32, %arg1: i32, %arg2: i32, %arg3: memref<2xi32, #tpu.memory_space<smem>>) -> (i32, i32, i32) {
    %c0_i32 = arith.constant 0 : i32
    %c0_i32_0 = arith.constant 0 : i32
    return %arg0, %arg2, %c0_i32 : i32, i32, i32
  }
  func.func @transform_4(%arg0: i32, %arg1: i32, %arg2: i32, %arg3: memref<2xi32, #tpu.memory_space<smem>>) -> (i32, i32, i32) {
    %c0_i32 = arith.constant 0 : i32
    %c0_i32_0 = arith.constant 0 : i32
    return %arg0, %arg1, %c0_i32 : i32, i32, i32
  }
}

</mosaic_0001>

<llo_original>
// kernel: tpu_custom_call.1
$region0: #{tpu_custom_call.1}
  #allocation0 [shape = 'u32[]', space=smem, size = 0x4, offset = 0x4, fixed_abs, tag = 'smem constant byte address 0x4 - core index']
  #allocation1 [shape = 'u32[144,128]{1,0:T(1,128)}', space=vmem, size = 0x12000, scoped, tag = 'internal scratch']
  #allocation2 [shape = 'f32[1,8,1]{2,1,0:T(8,128)}', space=vmem, size = 0x1000, scoped, tag = 'scratch operand']
  #allocation3 [shape = 'f32[1,8,1]{2,1,0:T(8,128)}', space=vmem, size = 0x1000, scoped, tag = 'scratch operand']
  #allocation4 [shape = 'f32[1,8,32]{2,1,0:T(8,128)}', space=vmem, size = 0x1000, scoped, tag = 'scratch operand']
  #allocation5 [shape = 's32[1]{0}', space=sflag, size = 0x4, scoped, tag = 'scoped memory for tpu_custom_call.1']
  #allocation6 [shape = 'u8[512]{0}', space=smem, size = 0x200, scoped, tag = 'prefetched SMEM operand 0']
  %s0 = inlined_call_operand.vmem [shape: s32[2], index: 0, kind: input, shape index: {}]
  %s1 = inlined_call_operand.vmem [shape: s32[2,1,1], index: 1, kind: input, shape index: {}]
  %s2 = inlined_call_operand.hbm [shape: f32[2,8,32], index: 2, kind: input, shape index: {}]
  %s3 = inlined_call_operand.hbm [shape: f32[2,8,32], index: 3, kind: input, shape index: {}]
  %s4 = inlined_call_operand.vmem [shape: f32[2,8,32], index: 4, kind: input, shape index: {}]
  %s5 = inlined_call_operand.hbm [shape: f32[2,8,32], index: 5, kind: output, shape index: {}]
  %s6 = sld [smem:[#allocation0]]
  $region73: #{tpu_custom_call.1} parent=0
    _
  %s8 = ssub.s32 1, %s6
  %s9 = scalar_select 0, %s8, %s6
  %s10 = sshll.u32 %s0, 4
  %s11 = int_to_ptr.vmem [resolvable:$true] %s10
  %13 = dma.vmem_to_smem %s11, 16, [#allocation6], [#allocation5]
  %14 = dma.done [#allocation5], 16
  %15 = sfence
  $region1: #{tpu_custom_call.1} parent=0
    #allocation7 [shape = 'u8[8192]{0}', space=vmem, size = 0x2000, scoped, tag = 'input window, operand 2']
    #allocation8 [shape = 's32[2]{0}', space=sflag, size = 0x8, scoped, tag = 'scoped memory for tpu_custom_call.1']
    #allocation9 [shape = 's32[2]{0}', space=sflag, size = 0x8, scoped, tag = 'scoped memory for tpu_custom_call.1']
    #allocation10 [shape = 'u8[8192]{0}', space=vmem, size = 0x2000, scoped, tag = 'input window, operand 3']
    #allocation11 [shape = 's32[2]{0}', space=sflag, size = 0x8, scoped, tag = 'scoped memory for tpu_custom_call.1']
    #allocation12 [shape = 'u8[8192]{0}', space=vmem, size = 0x2000, scoped, tag = 'output window, operand 0']
    %16 = vsyncpa [#allocation8], 0
    %s17 = scalar_lea.sflag [#allocation8], 1
    %18 = vsyncpa %s17, 0
    %19 = vsyncpa [#allocation11], 0
    %s20 = scalar_lea.sflag [#allocation11], 1
    %21 = vsyncpa %s20, 0
    %22 = vsyncpa [#allocation9], 0
    %s23 = scalar_lea.sflag [#allocation9], 1
    %24 = vsyncpa %s23, 0
    loop: start=0, step=1, limit=4
    $region2: #{tpu_custom_call.1} parent=1 // loop_pre_header
      _
    $region3: #{tpu_custom_call.1} parent=1 // loop_header
      %s26 = sphi 0, %s30
      %p27 = scmp.ge.s32.totalorder %s26, 4
      %s33 = sphi 0, %s52
      %s34 = sphi 0, %s48
      %s35 = sphi 0, %s44
      %s36 = sphi 0, %s33
      %s37 = sphi 0, %s34
      %s38 = sphi 0, %s35
      %s39 = sphi 0, %s36
      %s40 = sphi 0, %s37
      %s41 = sphi 0, %s38
      %s55 = sphi 0, %s57
      %s58 = sphi 0, %s55
      %s59 = sphi 0, %s58
      %s75 = sphi 0, %s59
      %s83 = sphi 0, %s85
      %s86 = sphi 0, %s83
      %s87 = sphi 0, %s86
      %s103 = sphi 0, %s87
      %s111 = sphi 0, %s113
      %s114 = sphi 0, %s111
      %s115 = sphi 0, %s114
      %s131 = sphi 0, %s115
      %s139 = sphi 0, %s141
      %s142 = sphi 0, %s139
      %s143 = sphi 0, %s142
      %s159 = sphi 0, %s143
      %s167 = sphi 0, %s169
      %s170 = sphi 0, %s167
      %s171 = sphi 0, %s170
      %s187 = sphi 0, %s171
    $region4: #{tpu_custom_call.1} parent=1 // loop_header_branch
      %29 = sbr.rel (%p27) target = $region8
    $region5: #{tpu_custom_call.1} parent=1 // loop_body
      %s31 = ssub.s32 %s26, 1
      %s32 = ssub.s32 %s26, 2
      %s42 = sadd.s32 1, %s35
      %p43 = scmp.ge.s32.totalorder %s42, 1
      %s44 = scalar_select %p43, 0, %s42
      %s45 = sadd.s32 1, %s34
      %s46 = scalar_select %p43, %s45, %s34
      %p47 = scmp.ge.s32.totalorder %s46, 1
      %s48 = scalar_select %p47, 0, %s46
      %s49 = sadd.s32 1, %s33
      %s50 = scalar_select %p47, %s49, %s33
      %p51 = scmp.ge.s32.totalorder %s50, 2
      %s52 = scalar_select %p51, 0, %s50
      %s53 = ssub.s32 %s33, %s52
      %p54 = scmp.eq.s32.totalorder %s53, 0
      %s56 = sadd.s32 %s55, 1
      %s57 = scalar_select %p54, %s55, %s56
      %p60 = pneg %p54
      %p61 = scmp.eq.s32.totalorder %s26, 1
      %p62 = por %p60, %p61
      %p63 = scmp.ne.s32.totalorder %s55, %s58
      %p64 = scmp.eq.s32.totalorder %s26, 0
      %p65 = por %p63, %p64
      %p66 = scmp.ne.s32.totalorder %s55, %s58
      %p67 = scmp.eq.s32.totalorder %s31, 1
      %p68 = por %p66, %p67
      %p69 = scmp.ne.s32.totalorder %s58, %s59
      %p70 = scmp.eq.s32.totalorder %s31, 0
      %p71 = por %p69, %p70
      %p72 = scmp.ne.s32.totalorder %s58, %s59
      %p73 = scmp.eq.s32.totalorder %s32, 1
      %p74 = por %p72, %p73
      %p76 = scmp.ne.s32.totalorder %s59, %s75
      %p77 = scmp.eq.s32.totalorder %s32, 0
      %p78 = por %p76, %p77
      %s79 = ssub.s32 %s33, %s52
      %s80 = ssub.s32 %s34, %s48
      %s81 = sor.u32 %s79, %s80
      %p82 = scmp.eq.s32.totalorder %s81, 0
      %s84 = sadd.s32 %s83, 1
      %s85 = scalar_select %p82, %s83, %s84
      %p88 = pneg %p82
      %p89 = scmp.eq.s32.totalorder %s26, 1
      %p90 = por %p88, %p89
      %p91 = scmp.ne.s32.totalorder %s83, %s86
      %p92 = scmp.eq.s32.totalorder %s26, 0
      %p93 = por %p91, %p92
      %p94 = scmp.ne.s32.totalorder %s83, %s86
      %p95 = scmp.eq.s32.totalorder %s31, 1
      %p96 = por %p94, %p95
      %p97 = scmp.ne.s32.totalorder %s86, %s87
      %p98 = scmp.eq.s32.totalorder %s31, 0
      %p99 = por %p97, %p98
      %p100 = scmp.ne.s32.totalorder %s86, %s87
      %p101 = scmp.eq.s32.totalorder %s32, 1
      %p102 = por %p100, %p101
      %p104 = scmp.ne.s32.totalorder %s87, %s103
      %p105 = scmp.eq.s32.totalorder %s32, 0
      %p106 = por %p104, %p105
      %s107 = ssub.s32 %s33, %s52
      %s108 = ssub.s32 %s35, %s44
      %s109 = sor.u32 %s107, %s108
      %p110 = scmp.eq.s32.totalorder %s109, 0
      %s112 = sadd.s32 %s111, 1
      %s113 = scalar_select %p110, %s111, %s112
      %p116 = pneg %p110
      %p117 = scmp.eq.s32.totalorder %s26, 1
      %p118 = por %p116, %p117
      %p119 = scmp.ne.s32.totalorder %s111, %s114
      %p120 = scmp.eq.s32.totalorder %s26, 0
      %p121 = por %p119, %p120
      %p122 = scmp.ne.s32.totalorder %s111, %s114
      %p123 = scmp.eq.s32.totalorder %s31, 1
      %p124 = por %p122, %p123
      %p125 = scmp.ne.s32.totalorder %s114, %s115
      %p126 = scmp.eq.s32.totalorder %s31, 0
      %p127 = por %p125, %p126
      %p128 = scmp.ne.s32.totalorder %s114, %s115
      %p129 = scmp.eq.s32.totalorder %s32, 1
      %p130 = por %p128, %p129
      %p132 = scmp.ne.s32.totalorder %s115, %s131
      %p133 = scmp.eq.s32.totalorder %s32, 0
      %p134 = por %p132, %p133
      %s135 = ssub.s32 %s33, %s52
      %s136 = ssub.s32 %s35, %s44
      %s137 = sor.u32 %s135, %s136
      %p138 = scmp.eq.s32.totalorder %s137, 0
      %s140 = sadd.s32 %s139, 1
      %s141 = scalar_select %p138, %s139, %s140
      %p144 = pneg %p138
      %p145 = scmp.eq.s32.totalorder %s26, 1
      %p146 = por %p144, %p145
      %p147 = scmp.ne.s32.totalorder %s139, %s142
      %p148 = scmp.eq.s32.totalorder %s26, 0
      %p149 = por %p147, %p148
      %p150 = scmp.ne.s32.totalorder %s139, %s142
      %p151 = scmp.eq.s32.totalorder %s31, 1
      %p152 = por %p150, %p151
      %p153 = scmp.ne.s32.totalorder %s142, %s143
      %p154 = scmp.eq.s32.totalorder %s31, 0
      %p155 = por %p153, %p154
      %p156 = scmp.ne.s32.totalorder %s142, %s143
      %p157 = scmp.eq.s32.totalorder %s32, 1
      %p158 = por %p156, %p157
      %p160 = scmp.ne.s32.totalorder %s143, %s159
      %p161 = scmp.eq.s32.totalorder %s32, 0
      %p162 = por %p160, %p161
      %s163 = ssub.s32 %s33, %s52
      %s164 = ssub.s32 %s34, %s48
      %s165 = sor.u32 %s163, %s164
      %p166 = scmp.eq.s32.totalorder %s165, 0
      %s168 = sadd.s32 %s167, 1
      %s169 = scalar_select %p166, %s167, %s168
      %p172 = pneg %p166
      %p173 = scmp.eq.s32.totalorder %s26, 1
      %p174 = por %p172, %p173
      %p175 = scmp.ne.s32.totalorder %s167, %s170
      %p176 = scmp.eq.s32.totalorder %s26, 0
      %p177 = por %p175, %p176
      %p178 = scmp.ne.s32.totalorder %s167, %s170
      %p179 = scmp.eq.s32.totalorder %s31, 1
      %p180 = por %p178, %p179
      %p181 = scmp.ne.s32.totalorder %s170, %s171
      %p182 = scmp.eq.s32.totalorder %s31, 0
      %p183 = por %p181, %p182
      %p184 = scmp.ne.s32.totalorder %s170, %s171
      %p185 = scmp.eq.s32.totalorder %s32, 1
      %p186 = por %p184, %p185
      %p188 = scmp.ne.s32.totalorder %s171, %s187
      %p189 = scmp.eq.s32.totalorder %s32, 0
      %p190 = por %p188, %p189
      %p191 = scmp.le.s32.totalorder 1, %s26
      %p192 = scmp.lt.s32.totalorder %s26, 3
      %p193 = pnand %p191, %p192
      %p194 = pneg %p193
      // Predicated region
      $region9: #{tpu_custom_call.1} parent=5 // pred_check
        _
      $region10: #{tpu_custom_call.1} parent=5 // pred_check_branch
        %196 = sbr.rel (%p193) target = $region12
      $region11: #{tpu_custom_call.1} parent=5 // pred_region
        %s197 = ssub.s32 %s26, 1
      $region12: #{tpu_custom_call.1} parent=5 // pred_fallthru
        _
      %p198 = scmp.lt.s32.totalorder %s26, 2
      // Predicated region
      $region13: #{tpu_custom_call.1} parent=5 // pred_check
        %p199 = pneg %p198
      $region14: #{tpu_custom_call.1} parent=5 // pred_check_branch
        %201 = sbr.rel (%p199) target = $region16
      $region15: #{tpu_custom_call.1} parent=5 // pred_region
        // Predicated region
        $region17: #{tpu_custom_call.1} parent=15 // pred_check
          %p202 = pneg %p65
        $region18: #{tpu_custom_call.1} parent=15 // pred_check_branch
          %204 = sbr.rel (%p202) target = $region20
        $region19: #{tpu_custom_call.1} parent=15 // pred_region
          %p205 = scmp.lt.s32.totalorder %s33, 1
          %s206 = scalar_select %p205, %s33, 1
          %s207 = scalar_lea.vmem %s1, %s206
        $region20: #{tpu_custom_call.1} parent=15 // pred_fallthru
          _
        // Predicated region
        $region21: #{tpu_custom_call.1} parent=15 // pred_check
          %p208 = pneg %p93
        $region22: #{tpu_custom_call.1} parent=15 // pred_check_branch
          %210 = sbr.rel (%p208) target = $region24
        $region23: #{tpu_custom_call.1} parent=15 // pred_region
          %s211 = sand.u32 %s83, 1
          %s212 = scalar_lea.sflag [#allocation8], %s211
          %s213 = sand.u32 %s83, 1
          %s214 = smul.addr %s213, 8
          %s215 = scalar_lea.vmem [#allocation7], %s214
          %s217 = ssub.s32 128, 128
          %218 = vsyncadd %s212, %s217
          %s219 = sadd.s32 %s34, %s33
          %s220 = smul.addr %s219, 128
          %s221 = scalar_lea.hbm %s2, %s220
          %s223 = sshll.u32 %s215, 4
          %s224 = int_to_ptr.vmem [resolvable:$true] %s223
          %226 = dma.hbm_to_vmem [thread:$0]  %s221, 128, %s224, %s212
        $region24: #{tpu_custom_call.1} parent=15 // pred_fallthru
          _
        // Predicated region
        $region25: #{tpu_custom_call.1} parent=15 // pred_check
          %p227 = pneg %p121
        $region26: #{tpu_custom_call.1} parent=15 // pred_check_branch
          %229 = sbr.rel (%p227) target = $region28
        $region27: #{tpu_custom_call.1} parent=15 // pred_region
          %s230 = sand.u32 %s111, 1
          %s231 = scalar_lea.sflag [#allocation11], %s230
          %s232 = sand.u32 %s111, 1
          %s233 = smul.addr %s232, 8
          %s234 = scalar_lea.vmem [#allocation10], %s233
          %s236 = ssub.s32 128, 128
          %237 = vsyncadd %s231, %s236
          %s238 = sadd.s32 %s35, %s33
          %s239 = smul.addr %s238, 128
          %s240 = scalar_lea.hbm %s3, %s239
          %s242 = sshll.u32 %s234, 4
          %s243 = int_to_ptr.vmem [resolvable:$true] %s242
          %245 = dma.hbm_to_vmem [thread:$0]  %s240, 128, %s243, %s231
        $region28: #{tpu_custom_call.1} parent=15 // pred_fallthru
          _
        // Predicated region
        $region29: #{tpu_custom_call.1} parent=15 // pred_check
          %p246 = pneg %p149
        $region30: #{tpu_custom_call.1} parent=15 // pred_check_branch
          %248 = sbr.rel (%p246) target = $region32
        $region31: #{tpu_custom_call.1} parent=15 // pred_region
          %p249 = scmp.lt.s32.totalorder %s33, 1
          %s250 = scalar_select %p249, %s33, 1
          %p251 = scmp.lt.s32.totalorder %s35, 0
          %s252 = scalar_select %p251, %s35, 0
          %s253 = sadd.s32 %s252, %s250
          %s254 = smul.addr %s253, 8
          %s255 = scalar_lea.vmem %s4, %s254
        $region32: #{tpu_custom_call.1} parent=15 // pred_fallthru
          _
      $region16: #{tpu_custom_call.1} parent=5 // pred_fallthru
        _
      %p256 = scmp.le.s32.totalorder 1, %s26
      %p257 = scmp.lt.s32.totalorder %s26, 3
      %p258 = pnand %p256, %p257
      %p259 = pneg %p258
      // Predicated region
      $region33: #{tpu_custom_call.1} parent=5 // pred_check
        _
      $region34: #{tpu_custom_call.1} parent=5 // pred_check_branch
        %261 = sbr.rel (%p258) target = $region36
      $region35: #{tpu_custom_call.1} parent=5 // pred_region
        %s262 = ssub.s32 %s26, 1
        %s263 = sand.u32 %s86, 1
        %s264 = scalar_lea.sflag [#allocation8], %s263
        %s265 = sand.u32 %s86, 1
        %s266 = smul.addr %s265, 8
        %s267 = scalar_lea.vmem [#allocation7], %s266
        // Predicated region
        $region37: #{tpu_custom_call.1} parent=35 // pred_check
          %p268 = pneg %p99
        $region38: #{tpu_custom_call.1} parent=35 // pred_check_branch
          %270 = sbr.rel (%p268) target = $region40
        $region39: #{tpu_custom_call.1} parent=35 // pred_region
          %271 = dma.done %s264, 128
        $region40: #{tpu_custom_call.1} parent=35 // pred_fallthru
          _
        %s272 = sand.u32 %s114, 1
        %s273 = scalar_lea.sflag [#allocation11], %s272
        %s274 = sand.u32 %s114, 1
        %s275 = smul.addr %s274, 8
        %s276 = scalar_lea.vmem [#allocation10], %s275
        // Predicated region
        $region41: #{tpu_custom_call.1} parent=35 // pred_check
          %p277 = pneg %p127
        $region42: #{tpu_custom_call.1} parent=35 // pred_check_branch
          %279 = sbr.rel (%p277) target = $region44
        $region43: #{tpu_custom_call.1} parent=35 // pred_region
          %280 = dma.done %s273, 128
        $region44: #{tpu_custom_call.1} parent=35 // pred_fallthru
          _
        %p281 = scmp.lt.s32.totalorder %s36, 1
        %s282 = scalar_select %p281, %s36, 1
        %s283 = scalar_lea.vmem %s1, %s282
        %p284 = pneg %p71
        %p285 = pneg %p68
        %s286 = sand.u32 %s86, 1
        %s287 = scalar_lea.sflag [#allocation8], %s286
        %s288 = sand.u32 %s86, 1
        %s289 = smul.addr %s288, 8
        %s290 = scalar_lea.vmem [#allocation7], %s289
        %p291 = pneg %p99
        %p292 = pneg %p96
        %s293 = sand.u32 %s114, 1
        %s294 = scalar_lea.sflag [#allocation11], %s293
        %s295 = sand.u32 %s114, 1
        %s296 = smul.addr %s295, 8
        %s297 = scalar_lea.vmem [#allocation10], %s296
        %p298 = pneg %p127
        %p299 = pneg %p124
        %p300 = scmp.lt.s32.totalorder %s36, 1
        %s301 = scalar_select %p300, %s36, 1
        %p302 = scmp.lt.s32.totalorder %s38, 0
        %s303 = scalar_select %p302, %s38, 0
        %s304 = sadd.s32 %s303, %s301
        %s305 = smul.addr %s304, 8
        %s306 = scalar_lea.vmem %s4, %s305
        %p307 = pneg %p155
        %p308 = pneg %p152
        %p309 = pneg %p183
        %p310 = pneg %p180
        %s311 = sand.u32 %s170, 1
        %s312 = scalar_lea.sflag [#allocation9], %s311
        %s313 = sand.u32 %s170, 1
        %s314 = smul.addr %s313, 8
        %s315 = scalar_lea.vmem [#allocation12], %s314
        %p316 = scmp.lt.s32.totalorder %s36, 1
        %s317 = scalar_select %p316, %s36, 1
        %s318 = scalar_lea.vmem %s1, %s317
        %p319 = scmp.lt.s32.totalorder %s36, 1
        %s320 = scalar_select %p319, %s36, 1
        %p321 = scmp.lt.s32.totalorder %s38, 0
        %s322 = scalar_select %p321, %s38, 0
        %s323 = sadd.s32 %s322, %s320
        %s324 = smul.addr %s323, 8
        %s325 = scalar_lea.vmem %s4, %s324
        %p326 = scmp.eq.s32.totalorder %s38, 0
        // Predicated region
        $region45: #{tpu_custom_call.1} parent=35 // pred_check
          %p327 = pneg %p326
        $region46: #{tpu_custom_call.1} parent=35 // pred_check_branch
          %329 = sbr.rel (%p327) target = $region48
        $region47: #{tpu_custom_call.1} parent=35 // pred_region
          %vm330 = vcmask 7168
          %331 = vst.msk [vmem:[#allocation2] sm:$0xff] %vm330, -inf
          %332 = vst.msk [vmem:[#allocation3] sm:$0xff] %vm330, 0.0
          %vm333 = vcmask 261120
          %334 = vst.msk [vmem:[#allocation4] sm:$0xff] %vm333, 0.0
        $region48: #{tpu_custom_call.1} parent=35 // pred_fallthru
          _
        %s335 = sld [smem:[#allocation6 + %s36]]
        %s336 = smul.u32 %s38, 8
        %p337 = scmp.lt.s32.totalorder %s336, %s335
        %p338 = scmp.eq.s32.totalorder %s335, 0
        %p339 = por %p337, %p338
        %s340 = sadd.s32 %s336, 8
        %p341 = scmp.le.s32.totalorder %s340, %s335
        %p342 = pnand %p339, %p341
        %p343 = pneg %p342
        // Predicated region
        $region49: #{tpu_custom_call.1} parent=35 // pred_check
          _
        $region50: #{tpu_custom_call.1} parent=35 // pred_check_branch
          %345 = sbr.rel (%p342) target = $region52
        $region51: #{tpu_custom_call.1} parent=35 // pred_region
          %v346 = vld [vmem:[%s267] sm:$0xff]
          %v347 = vld [vmem:[%s276] sm:$0xff]
          %v348 = vld [vmem:[%s325] sm:$0xff]
          %vm349 = vcmask 261120
          %v351 = vsel %vm349, %v346, 0
          %v354 = vsel %vm349, %v347, 0
          %356 = vmatprep.subr.mxu0 0.0
          %357 = vmatpush1.xpose.msra.mxu0 %v354
          %358 = vmatprep.subr.mxu0 0.0
          %359 = vmatpush1.xpose.msra.mxu0 0.0
          %360 = vmatprep.subr.mxu0 0.0
          %361 = vmatpush1.xpose.msra.mxu0 0.0
          %362 = vmatprep.subr.mxu0 0.0
          %363 = vmatpush1.xpose.msra.mxu0 0.0
          %364 = vmatprep.subr.mxu0 0.0
          %365 = vmatpush1.xpose.msra.mxu0 0.0
          %366 = vmatprep.subr.mxu0 0.0
          %367 = vmatpush1.xpose.msra.mxu0 0.0
          %368 = vmatprep.subr.mxu0 0.0
          %369 = vmatpush1.xpose.msra.mxu0 0.0
          %370 = vmatprep.subr.mxu0 0.0
          %371 = vmatpush1.xpose.msra.mxu0 0.0
          %372 = vmatprep.subr.mxu0 0.0
          %373 = vmatpush1.xpose.msra.mxu0 0.0
          %374 = vmatprep.subr.mxu0 0.0
          %375 = vmatpush1.xpose.msra.mxu0 0.0
          %376 = vmatprep.subr.mxu0 0.0
          %377 = vmatpush1.xpose.msra.mxu0 0.0
          %378 = vmatprep.subr.mxu0 0.0
          %379 = vmatpush1.xpose.msra.mxu0 0.0
          %380 = vmatprep.subr.mxu0 0.0
          %381 = vmatpush1.xpose.msra.mxu0 0.0
          %382 = vmatprep.subr.mxu0 0.0
          %383 = vmatpush1.xpose.msra.mxu0 0.0
          %384 = vmatprep.subr.mxu0 0.0
          %385 = vmatpush1.xpose.msra.mxu0 0.0
          %386 = vmatprep.subr.mxu0 0.0
          %387 = vmatpush1.xpose.msra.mxu0 0.0
          %388 = vmatprep.subr.mxu0 0.0
          %389 = vmatpush1.xpose.msra.mxu0 0.0
          %390 = vmatprep.subr.mxu0 0.0
          %391 = vmatpush1.xpose.msra.mxu0 0.0
          %392 = vmatprep.subr.mxu0 0.0
          %393 = vmatpush1.xpose.msra.mxu0 0.0
          %394 = vmatprep.subr.mxu0 0.0
          %395 = vmatpush1.xpose.msra.mxu0 0.0
          %396 = vmatprep.subr.mxu0 0.0
          %397 = vmatpush1.xpose.msra.mxu0 0.0
          %398 = vmatprep.subr.mxu0 0.0
          %399 = vmatpush1.xpose.msra.mxu0 0.0
          %400 = vmatprep.subr.mxu0 0.0
          %401 = vmatpush1.xpose.msra.mxu0 0.0
          %402 = vmatprep.subr.mxu0 0.0
          %403 = vmatpush1.xpose.msra.mxu0 0.0
          %404 = vmatprep.subr.mxu0 0.0
          %405 = vmatpush1.xpose.msra.mxu0 0.0
          %406 = vmatprep.subr.mxu0 0.0
          %407 = vmatpush1.xpose.msra.mxu0 0.0
          %408 = vmatprep.subr.mxu0 0.0
          %409 = vmatpush1.xpose.msra.mxu0 0.0
          %410 = vmatprep.subr.mxu0 0.0
          %411 = vmatpush1.xpose.msra.mxu0 0.0
          %412 = vmatprep.subr.mxu0 0.0
          %413 = vmatpush1.xpose.msra.mxu0 0.0
          %414 = vmatprep.subr.mxu0 0.0
          %415 = vmatpush1.xpose.msra.mxu0 0.0
          %416 = vmatprep.subr.mxu0 0.0
          %417 = vmatpush1.xpose.msra.mxu0 0.0
          %418 = vmatprep.subr.mxu0 0.0
          %419 = vmatpush1.xpose.msra.mxu0 0.0
          %420 = vmatprep.mubr.f32.mxu0 0.0
          %421 = vmatmul.mubr.f32.gmra.mrb[0].mxu0 %v351
          %v422 = vpop.f32.mrb[0].mxu0
          %v423 = vadd.f32 0.0, %v422
          %v424 = vpop.f32.mrb[0].mxu0
          %425 = vdwg.mxu0
          %v426 = vld [vmem:[#allocation2] sm:$0xff]
          %vm427 = vcmask 64512
          %v428 = vsel %vm427, %v423, -inf
          %429 = vmax.xlane.f32.xlu0 %v428
          %v430 = vpop.xlane.xlu0 %429
          %v431 = vmax.f32 %v426, %v430
          %v432 = vsub.f32 %v426, %v431
          %v433 = vpow.pop %v432
          %435 = vset.pattern.permute.xlu0 0
          %436 = vperm.xlu0 %435, %v431
          %v437 = vpop.permute.xlu0 %436
          %v439 = vsub.f32 %v423, %v437
          %v440 = vpow.pop %v439
          %v441 = vld [vmem:[#allocation3] sm:$0xff]
          %v442 = vmul.f32 %v433, %v441
          %v443 = vsel %vm427, %v440, 0.0
          %444 = vadd.xlane.f32.xlu0 %v443
          %v445 = vpop.xlane.xlu0 %444
          %v446 = vadd.f32 %v442, %v445
          %vm447 = vcmask 7168
          %448 = vst.msk [vmem:[#allocation3] sm:$0xff] %vm447, %v446
          %v450 = vsel %vm427, %v440, 0
          %452 = vmatprep.subr.mxu0 0.0
          %453 = vmatpush1.msra.mxu0 %v348
          %454 = vmatprep.subr.mxu0 0.0
          %455 = vmatpush1.msra.mxu0 0.0
          %456 = vmatprep.subr.mxu0 0.0
          %457 = vmatpush1.msra.mxu0 0.0
          %458 = vmatprep.subr.mxu0 0.0
          %459 = vmatpush1.msra.mxu0 0.0
          %460 = vmatprep.subr.mxu0 0.0
          %461 = vmatpush1.msra.mxu0 0.0
          %462 = vmatprep.subr.mxu0 0.0
          %463 = vmatpush1.msra.mxu0 0.0
          %464 = vmatprep.subr.mxu0 0.0
          %465 = vmatpush1.msra.mxu0 0.0
          %466 = vmatprep.subr.mxu0 0.0
          %467 = vmatpush1.msra.mxu0 0.0
          %468 = vmatprep.subr.mxu0 0.0
          %469 = vmatpush1.msra.mxu0 0.0
          %470 = vmatprep.subr.mxu0 0.0
          %471 = vmatpush1.msra.mxu0 0.0
          %472 = vmatprep.subr.mxu0 0.0
          %473 = vmatpush1.msra.mxu0 0.0
          %474 = vmatprep.subr.mxu0 0.0
          %475 = vmatpush1.msra.mxu0 0.0
          %476 = vmatprep.subr.mxu0 0.0
          %477 = vmatpush1.msra.mxu0 0.0
          %478 = vmatprep.subr.mxu0 0.0
          %479 = vmatpush1.msra.mxu0 0.0
          %480 = vmatprep.subr.mxu0 0.0
          %481 = vmatpush1.msra.mxu0 0.0
          %482 = vmatprep.subr.mxu0 0.0
          %483 = vmatpush1.msra.mxu0 0.0
          %484 = vmatprep.subr.mxu0 0.0
          %485 = vmatpush1.msra.mxu0 0.0
          %486 = vmatprep.subr.mxu0 0.0
          %487 = vmatpush1.msra.mxu0 0.0
          %488 = vmatprep.subr.mxu0 0.0
          %489 = vmatpush1.msra.mxu0 0.0
          %490 = vmatprep.subr.mxu0 0.0
          %491 = vmatpush1.msra.mxu0 0.0
          %492 = vmatprep.subr.mxu0 0.0
          %493 = vmatpush1.msra.mxu0 0.0
          %494 = vmatprep.subr.mxu0 0.0
          %495 = vmatpush1.msra.mxu0 0.0
          %496 = vmatprep.subr.mxu0 0.0
          %497 = vmatpush1.msra.mxu0 0.0
          %498 = vmatprep.subr.mxu0 0.0
          %499 = vmatpush1.msra.mxu0 0.0
          %500 = vmatprep.subr.mxu0 0.0
          %501 = vmatpush1.msra.mxu0 0.0
          %502 = vmatprep.subr.mxu0 0.0
          %503 = vmatpush1.msra.mxu0 0.0
          %504 = vmatprep.subr.mxu0 0.0
          %505 = vmatpush1.msra.mxu0 0.0
          %506 = vmatprep.subr.mxu0 0.0
          %507 = vmatpush1.msra.mxu0 0.0
          %508 = vmatprep.subr.mxu0 0.0
          %509 = vmatpush1.msra.mxu0 0.0
          %510 = vmatprep.subr.mxu0 0.0
          %511 = vmatpush1.msra.mxu0 0.0
          %512 = vmatprep.subr.mxu0 0.0
          %513 = vmatpush1.msra.mxu0 0.0
          %514 = vmatprep.subr.mxu0 0.0
          %515 = vmatpush1.msra.mxu0 0.0
          %516 = vmatprep.mubr.f32.mxu0 0.0
          %517 = vmatmul.mubr.f32.gmra.mrb[0].mxu0 %v450
          %v518 = vpop.f32.mrb[0].mxu0
          %v519 = vadd.f32 0.0, %v518
          %v520 = vpop.f32.mrb[0].mxu0
          %521 = vdwg.mxu0
          %v522 = vld [vmem:[#allocation4] sm:$0xff]
          %524 = vset.pattern.permute.xlu0 0
          %525 = vperm.xlu0 %524, %v433
          %v526 = vpop.permute.xlu0 %525
          %v528 = vmul.f32 %v526, %v522
          %v529 = vadd.f32 %v528, %v519
          %530 = vst.msk [vmem:[#allocation4] sm:$0xff] %vm349, %v529
          %531 = vst.msk [vmem:[#allocation2] sm:$0xff] %vm447, %v431
        $region52: #{tpu_custom_call.1} parent=35 // pred_fallthru
          _
        %p532 = scmp.gt.s32.totalorder %s340, %s335
        %p533 = pnand %p339, %p532
        %p534 = pneg %p533
        // Predicated region
        $region53: #{tpu_custom_call.1} parent=35 // pred_check
          _
        $region54: #{tpu_custom_call.1} parent=35 // pred_check_branch
          %536 = sbr.rel (%p533) target = $region56
        $region55: #{tpu_custom_call.1} parent=35 // pred_region
          %v537 = vld [vmem:[%s267] sm:$0xff]
          %v538 = vld [vmem:[%s276] sm:$0xff]
          %v539 = vld [vmem:[%s325] sm:$0xff]
          %vm540 = vcmask 261120
          %v542 = vsel %vm540, %v537, 0
          %v545 = vsel %vm540, %v538, 0
          %547 = vmatprep.subr.mxu0 0.0
          %548 = vmatpush1.xpose.msra.mxu0 %v545
          %549 = vmatprep.subr.mxu0 0.0
          %550 = vmatpush1.xpose.msra.mxu0 0.0
          %551 = vmatprep.subr.mxu0 0.0
          %552 = vmatpush1.xpose.msra.mxu0 0.0
          %553 = vmatprep.subr.mxu0 0.0
          %554 = vmatpush1.xpose.msra.mxu0 0.0
          %555 = vmatprep.subr.mxu0 0.0
          %556 = vmatpush1.xpose.msra.mxu0 0.0
          %557 = vmatprep.subr.mxu0 0.0
          %558 = vmatpush1.xpose.msra.mxu0 0.0
          %559 = vmatprep.subr.mxu0 0.0
          %560 = vmatpush1.xpose.msra.mxu0 0.0
          %561 = vmatprep.subr.mxu0 0.0
          %562 = vmatpush1.xpose.msra.mxu0 0.0
          %563 = vmatprep.subr.mxu0 0.0
          %564 = vmatpush1.xpose.msra.mxu0 0.0
          %565 = vmatprep.subr.mxu0 0.0
          %566 = vmatpush1.xpose.msra.mxu0 0.0
          %567 = vmatprep.subr.mxu0 0.0
          %568 = vmatpush1.xpose.msra.mxu0 0.0
          %569 = vmatprep.subr.mxu0 0.0
          %570 = vmatpush1.xpose.msra.mxu0 0.0
          %571 = vmatprep.subr.mxu0 0.0
          %572 = vmatpush1.xpose.msra.mxu0 0.0
          %573 = vmatprep.subr.mxu0 0.0
          %574 = vmatpush1.xpose.msra.mxu0 0.0
          %575 = vmatprep.subr.mxu0 0.0
          %576 = vmatpush1.xpose.msra.mxu0 0.0
          %577 = vmatprep.subr.mxu0 0.0
          %578 = vmatpush1.xpose.msra.mxu0 0.0
          %579 = vmatprep.subr.mxu0 0.0
          %580 = vmatpush1.xpose.msra.mxu0 0.0
          %581 = vmatprep.subr.mxu0 0.0
          %582 = vmatpush1.xpose.msra.mxu0 0.0
          %583 = vmatprep.subr.mxu0 0.0
          %584 = vmatpush1.xpose.msra.mxu0 0.0
          %585 = vmatprep.subr.mxu0 0.0
          %586 = vmatpush1.xpose.msra.mxu0 0.0
          %587 = vmatprep.subr.mxu0 0.0
          %588 = vmatpush1.xpose.msra.mxu0 0.0
          %589 = vmatprep.subr.mxu0 0.0
          %590 = vmatpush1.xpose.msra.mxu0 0.0
          %591 = vmatprep.subr.mxu0 0.0
          %592 = vmatpush1.xpose.msra.mxu0 0.0
          %593 = vmatprep.subr.mxu0 0.0
          %594 = vmatpush1.xpose.msra.mxu0 0.0
          %595 = vmatprep.subr.mxu0 0.0
          %596 = vmatpush1.xpose.msra.mxu0 0.0
          %597 = vmatprep.subr.mxu0 0.0
          %598 = vmatpush1.xpose.msra.mxu0 0.0
          %599 = vmatprep.subr.mxu0 0.0
          %600 = vmatpush1.xpose.msra.mxu0 0.0
          %601 = vmatprep.subr.mxu0 0.0
          %602 = vmatpush1.xpose.msra.mxu0 0.0
          %603 = vmatprep.subr.mxu0 0.0
          %604 = vmatpush1.xpose.msra.mxu0 0.0
          %605 = vmatprep.subr.mxu0 0.0
          %606 = vmatpush1.xpose.msra.mxu0 0.0
          %607 = vmatprep.subr.mxu0 0.0
          %608 = vmatpush1.xpose.msra.mxu0 0.0
          %609 = vmatprep.subr.mxu0 0.0
          %610 = vmatpush1.xpose.msra.mxu0 0.0
          %611 = vmatprep.mubr.f32.mxu0 0.0
          %612 = vmatmul.mubr.f32.gmra.mrb[0].mxu0 %v542
          %v613 = vpop.f32.mrb[0].mxu0
          %v614 = vadd.f32 0.0, %v613
          %v615 = vpop.f32.mrb[0].mxu0
          %616 = vdwg.mxu0
          %v617 = vld [vmem:[%s318] sm:$0x1]
          %v618 = vlaneseq
          %v619 = vand.u32 %v618, 127
          %v620 = vstv %s336
          %v621 = vadd.s32 %v619, %v620
          %v622 = vlaneseq
          %v623 = vshrl.u32 %v622, 7
          %v624 = vsub.s32 0, %v623
          %v625 = vrot.slane %v617, %v624
          %626 = vset.pattern.permute.xlu0 0
          %627 = vperm.xlu0 %626, %v625
          %v628 = vpop.permute.xlu0 %627
          %vm629 = vcmp.lt.s32.totalorder %v621, %v628
          %v630 = vsel %vm629, %v614, -1442695.0
          %v631 = vld [vmem:[#allocation2] sm:$0xff]
          %vm632 = vcmask 64512
          %v633 = vsel %vm632, %v630, -inf
          %634 = vmax.xlane.f32.xlu0 %v633
          %v635 = vpop.xlane.xlu0 %634
          %v636 = vmax.f32 %v631, %v635
          %v637 = vsub.f32 %v631, %v636
          %v638 = vpow.pop %v637
          %640 = vset.pattern.permute.xlu0 0
          %641 = vperm.xlu0 %640, %v636
          %v642 = vpop.permute.xlu0 %641
          %v644 = vsub.f32 %v630, %v642
          %v645 = vpow.pop %v644
          %v646 = vld [vmem:[#allocation3] sm:$0xff]
          %v647 = vmul.f32 %v638, %v646
          %v648 = vsel %vm632, %v645, 0.0
          %649 = vadd.xlane.f32.xlu0 %v648
          %v650 = vpop.xlane.xlu0 %649
          %v651 = vadd.f32 %v647, %v650
          %vm652 = vcmask 7168
          %653 = vst.msk [vmem:[#allocation3] sm:$0xff] %vm652, %v651
          %v655 = vsel %vm632, %v645, 0
          %657 = vmatprep.subr.mxu0 0.0
          %658 = vmatpush1.msra.mxu0 %v539
          %659 = vmatprep.subr.mxu0 0.0
          %660 = vmatpush1.msra.mxu0 0.0
          %661 = vmatprep.subr.mxu0 0.0
          %662 = vmatpush1.msra.mxu0 0.0
          %663 = vmatprep.subr.mxu0 0.0
          %664 = vmatpush1.msra.mxu0 0.0
          %665 = vmatprep.subr.mxu0 0.0
          %666 = vmatpush1.msra.mxu0 0.0
          %667 = vmatprep.subr.mxu0 0.0
          %668 = vmatpush1.msra.mxu0 0.0
          %669 = vmatprep.subr.mxu0 0.0
          %670 = vmatpush1.msra.mxu0 0.0
          %671 = vmatprep.subr.mxu0 0.0
          %672 = vmatpush1.msra.mxu0 0.0
          %673 = vmatprep.subr.mxu0 0.0
          %674 = vmatpush1.msra.mxu0 0.0
          %675 = vmatprep.subr.mxu0 0.0
          %676 = vmatpush1.msra.mxu0 0.0
          %677 = vmatprep.subr.mxu0 0.0
          %678 = vmatpush1.msra.mxu0 0.0
          %679 = vmatprep.subr.mxu0 0.0
          %680 = vmatpush1.msra.mxu0 0.0
          %681 = vmatprep.subr.mxu0 0.0
          %682 = vmatpush1.msra.mxu0 0.0
          %683 = vmatprep.subr.mxu0 0.0
          %684 = vmatpush1.msra.mxu0 0.0
          %685 = vmatprep.subr.mxu0 0.0
          %686 = vmatpush1.msra.mxu0 0.0
          %687 = vmatprep.subr.mxu0 0.0
          %688 = vmatpush1.msra.mxu0 0.0
          %689 = vmatprep.subr.mxu0 0.0
          %690 = vmatpush1.msra.mxu0 0.0
          %691 = vmatprep.subr.mxu0 0.0
          %692 = vmatpush1.msra.mxu0 0.0
          %693 = vmatprep.subr.mxu0 0.0
          %694 = vmatpush1.msra.mxu0 0.0
          %695 = vmatprep.subr.mxu0 0.0
          %696 = vmatpush1.msra.mxu0 0.0
          %697 = vmatprep.subr.mxu0 0.0
          %698 = vmatpush1.msra.mxu0 0.0
          %699 = vmatprep.subr.mxu0 0.0
          %700 = vmatpush1.msra.mxu0 0.0
          %701 = vmatprep.subr.mxu0 0.0
          %702 = vmatpush1.msra.mxu0 0.0
          %703 = vmatprep.subr.mxu0 0.0
          %704 = vmatpush1.msra.mxu0 0.0
          %705 = vmatprep.subr.mxu0 0.0
          %706 = vmatpush1.msra.mxu0 0.0
          %707 = vmatprep.subr.mxu0 0.0
          %708 = vmatpush1.msra.mxu0 0.0
          %709 = vmatprep.subr.mxu0 0.0
          %710 = vmatpush1.msra.mxu0 0.0
          %711 = vmatprep.subr.mxu0 0.0
          %712 = vmatpush1.msra.mxu0 0.0
          %713 = vmatprep.subr.mxu0 0.0
          %714 = vmatpush1.msra.mxu0 0.0
          %715 = vmatprep.subr.mxu0 0.0
          %716 = vmatpush1.msra.mxu0 0.0
          %717 = vmatprep.subr.mxu0 0.0
          %718 = vmatpush1.msra.mxu0 0.0
          %719 = vmatprep.subr.mxu0 0.0
          %720 = vmatpush1.msra.mxu0 0.0
          %721 = vmatprep.mubr.f32.mxu0 0.0
          %722 = vmatmul.mubr.f32.gmra.mrb[0].mxu0 %v655
          %v723 = vpop.f32.mrb[0].mxu0
          %v724 = vadd.f32 0.0, %v723
          %v725 = vpop.f32.mrb[0].mxu0
          %726 = vdwg.mxu0
          %v727 = vld [vmem:[#allocation4] sm:$0xff]
          %729 = vset.pattern.permute.xlu0 0
          %730 = vperm.xlu0 %729, %v638
          %v731 = vpop.permute.xlu0 %730
          %v733 = vmul.f32 %v731, %v727
          %v734 = vadd.f32 %v733, %v724
          %735 = vst.msk [vmem:[#allocation4] sm:$0xff] %vm540, %v734
          %736 = vst.msk [vmem:[#allocation2] sm:$0xff] %vm652, %v636
        $region56: #{tpu_custom_call.1} parent=35 // pred_fallthru
          _
        // Predicated region
        $region57: #{tpu_custom_call.1} parent=35 // pred_check
          %p737 = pneg %p326
        $region58: #{tpu_custom_call.1} parent=35 // pred_check_branch
          %739 = sbr.rel (%p737) target = $region60
        $region59: #{tpu_custom_call.1} parent=35 // pred_region
          %v740 = vld [vmem:[#allocation3] sm:$0xff]
          %v741 = vrcp.pop %v740
          %v742 = vld [vmem:[#allocation4] sm:$0xff]
          %744 = vset.pattern.permute.xlu0 0
          %745 = vperm.xlu0 %744, %v741
          %v746 = vpop.permute.xlu0 %745
          %v748 = vmul.f32 %v742, %v746
          %vm749 = vcmask 261120
          %750 = vst.msk [vmem:[%s315] sm:$0xff] %vm749, %v748
        $region60: #{tpu_custom_call.1} parent=35 // pred_fallthru
          _
        %s751 = sand.u32 %s170, 1
        %s752 = scalar_lea.sflag [#allocation9], %s751
        %s753 = sand.u32 %s170, 1
        %s754 = smul.addr %s753, 8
        %s755 = scalar_lea.vmem [#allocation12], %s754
        // Predicated region
        $region61: #{tpu_custom_call.1} parent=35 // pred_check
          %p756 = pneg %p180
        $region62: #{tpu_custom_call.1} parent=35 // pred_check_branch
          %758 = sbr.rel (%p756) target = $region64
        $region63: #{tpu_custom_call.1} parent=35 // pred_region
          %s760 = ssub.s32 128, 128
          %761 = vsyncadd %s752, %s760
          %s762 = sadd.s32 %s37, %s36
          %s763 = smul.addr %s762, 128
          %s764 = scalar_lea.hbm %s5, %s763
          %s766 = sshll.u32 %s755, 4
          %s767 = int_to_ptr.vmem [resolvable:$true] %s766
          %769 = dma.vmem_to_hbm [thread:$0]  %s767, 128, %s764, %s752
        $region64: #{tpu_custom_call.1} parent=35 // pred_fallthru
          _
      $region36: #{tpu_custom_call.1} parent=5 // pred_fallthru
        _
      %p770 = scmp.le.s32.totalorder 2, %s26
      // Predicated region
      $region65: #{tpu_custom_call.1} parent=5 // pred_check
        %p771 = pneg %p770
      $region66: #{tpu_custom_call.1} parent=5 // pred_check_branch
        %773 = sbr.rel (%p771) target = $region68
      $region67: #{tpu_custom_call.1} parent=5 // pred_region
        %s774 = ssub.s32 %s26, 2
        // Predicated region
        $region69: #{tpu_custom_call.1} parent=67 // pred_check
          %p775 = pneg %p186
        $region70: #{tpu_custom_call.1} parent=67 // pred_check_branch
          %777 = sbr.rel (%p775) target = $region72
        $region71: #{tpu_custom_call.1} parent=67 // pred_region
          %s778 = sand.u32 %s171, 1
          %s779 = scalar_lea.sflag [#allocation9], %s778
          %s780 = sand.u32 %s171, 1
          %s781 = smul.addr %s780, 8
          %s782 = scalar_lea.vmem [#allocation12], %s781
          %783 = dma.done %s779, 128
        $region72: #{tpu_custom_call.1} parent=67 // pred_fallthru
          _
      $region68: #{tpu_custom_call.1} parent=5 // pred_fallthru
        _
    $region6: #{tpu_custom_call.1} parent=1 // loop_footer
      %s30 = sadd.s32 1, %s26
    $region7: #{tpu_custom_call.1} parent=1 // loop_footer_branch
      %25 = sbr.rel target = $region3
    $region8: #{tpu_custom_call.1} parent=1 // loop_exit
      _
    %784 = vsyncpa [#allocation8], 1
    %s785 = scalar_lea.sflag [#allocation8], 1
    %786 = vsyncpa %s785, 1
    %787 = vsyncpa [#allocation11], 1
    %s788 = scalar_lea.sflag [#allocation11], 1
    %789 = vsyncpa %s788, 1
    %790 = vsyncpa [#allocation9], 1
    %s791 = scalar_lea.sflag [#allocation9], 1
    %792 = vsyncpa %s791, 1

</llo_original>
